<compile_context>
chip_gen: v6e
topology: v6e:2x2x1
jax: 0.10.0
libtpu: 0.0.40
codegen_flags: <defaults>
</compile_context>

<pallas_src>
import jax
import jax.numpy as jnp
from jax.experimental import pallas as pl
from jax.experimental.pallas import tpu as pltpu


def _scale_spatial_kernel(x_ref, a_ref, o_ref):
    # x_ref: (1, C_BLK, S_BLK) tile of x
    # a_ref: (1, 1,     S_BLK) tile of the spatial map (broadcast over channels)
    o_ref[...] = (x_ref[...] * a_ref[...]).astype(o_ref.dtype)


def _choose_blocks(C: int, S: int, dtype_size: int):
    """Pick (C_BLOCK, S_BLOCK) targeting ~4 MiB x-tiles with a lane-dense last dim."""
    target = 4 * 1024 * 1024  # bytes per x tile

    # Lane axis: keep the full flattened spatial dim unless it is both
    # lane-aligned (multiple of 128) and larger than the target on its own.
    if S % 128 == 0 and S * dtype_size > target:
        s_block = 128 * max(1, target // (128 * dtype_size))
        s_block = min(s_block, S)
    else:
        # Full-dim block is always legal (even if S is not a multiple of 128).
        s_block = S

    # Channel (sublane) axis: must be a multiple of 8 or the full dim C.
    c_block = max(1, target // (s_block * dtype_size))
    if c_block >= C:
        c_block = C                     # full dim -> always legal
    elif c_block >= 8:
        c_block = (c_block // 8) * 8    # keep sublane-aligned
    else:
        c_block = min(C, 8)             # C > 8 here, so this is 8 (legal)
    return c_block, s_block


def scale_spatial(x: jax.Array, a: jax.Array) -> jax.Array:
    """x: (N, C, H, W); a: (N, 1, H, W) -> (N, C, H, W)."""
    N, C, H, W = x.shape
    assert a.shape == (N, 1, H, W), f"expected (N,1,H,W) spatial map, got {a.shape}"

    S = H * W
    out_dtype = jnp.result_type(x.dtype, a.dtype)

    # Flatten spatial dims so the lane axis is dense (contiguous reshape: no copy).
    x2 = x.reshape(N, C, S)
    a2 = a.reshape(N, 1, S)

    x_isz = jnp.dtype(x.dtype).itemsize
    a_isz = jnp.dtype(a.dtype).itemsize
    o_isz = jnp.dtype(out_dtype).itemsize

    c_blk, s_blk = _choose_blocks(C, S, x_isz)
    # Channel-block axis innermost so `a` (independent of it) is not re-fetched.
    grid = (N, pl.cdiv(S, s_blk), pl.cdiv(C, c_blk))

    # Double-buffered working set: 2 x (x tile + out tile + a tile) + margin.
    x_tile_b = c_blk * s_blk * x_isz
    o_tile_b = c_blk * s_blk * o_isz
    a_tile_b = s_blk * a_isz
    vmem_bytes = 2 * (x_tile_b + o_tile_b + a_tile_b) + (1 << 20)
    # Clamp to a value safe on every generation (v7x physical VMEM is 64 MiB
    # per TensorCore; v5e/v6e have 128 MiB).
    vmem_bytes = int(min(max(vmem_bytes, 4 << 20), 32 << 20))

    out = pl.pallas_call(
        _scale_spatial_kernel,
        out_shape=jax.ShapeDtypeStruct((N, C, S), out_dtype),
        grid=grid,
        in_specs=[
            # x: (1, C_BLK, S_BLK) tile per (n, s-block, c-block) grid point
            pl.BlockSpec((1, c_blk, s_blk), lambda n, s, c: (n, c, s)),
            # a: channel-block index ignored -> broadcast over all channels;
            #    block index constant across the innermost (c) axis -> DMA reuse.
            pl.BlockSpec((1, 1, s_blk), lambda n, s, c: (n, 0, s)),
        ],
        out_specs=pl.BlockSpec((1, c_blk, s_blk), lambda n, s, c: (n, c, s)),
        compiler_params=pltpu.CompilerParams(
            dimension_semantics=("parallel", "parallel", "parallel"),
            vmem_limit_bytes=vmem_bytes,
        ),
    )(x2, a2)

    return out.reshape(N, C, H, W)


class ScaleSpatial:
    """JAX/Pallas mirror of the PyTorch ScaleSpatial module."""

    def __init__(self, layers):
        self.layers = layers

    def __call__(self, x, outputs):
        a = outputs[self.layers[0]]
        return scale_spatial(x, a)


if __name__ == "__main__":
    key = jax.random.PRNGKey(0)
    k_x, k_a = jax.random.split(key)

    N, C, H, W = 2, 4, 16, 16
    x = jax.random.normal(k_x, (N, C, H, W), dtype=jnp.float32)
    # Spatial attention map produced by some earlier layer (sigmoid-like range).
    a = jax.nn.sigmoid(jax.random.normal(k_a, (N, 1, H, W), dtype=jnp.float32))

    # Simulated `outputs` dict of prior layer activations, as in the module.
    outputs = {-3: a}
    module = ScaleSpatial(layers=[-3])

    out = module(x, outputs)
    out = jax.block_until_ready(out)

    # Correctness check against plain-JAX broadcasting multiply.
    ref = x * a
    assert out.shape == (N, C, H, W)
    assert out.dtype == ref.dtype
    assert jnp.allclose(out, ref, atol=1e-6, rtol=1e-6)

    print("KERNEL_OK")
</pallas_src>

<mosaic_0001>
module attributes {stable_mosaic.version = 11 : i64} {
  func.func @_scale_spatial_kernel(%arg0: i32, %arg1: i32, %arg2: i32, %arg3: memref<1x4x256xf32, #tpu.memory_space<vmem>>, %arg4: memref<1x1x256xf32, #tpu.memory_space<vmem>>, %arg5: memref<1x4x256xf32, #tpu.memory_space<vmem>>) attributes {dimension_semantics = [#tpu.dimension_semantics<parallel>, #tpu.dimension_semantics<parallel>, #tpu.dimension_semantics<parallel>], iteration_bounds = array<i64: 2, 1, 1>, scalar_prefetch = 0 : i64, scratch_operands = 0 : i64, tpu.core_type = #tpu.core_type<tc>, window_params = [{transform_indices = @transform_0, window_bounds = array<i64: 1, 4, 256>}, {transform_indices = @transform_1, window_bounds = array<i64: 1, 1, 256>}, {transform_indices = @transform_2, window_bounds = array<i64: 1, 4, 256>}]} {
    %c0 = arith.constant 0 : index
    %c0_0 = arith.constant 0 : index
    %c0_1 = arith.constant 0 : index
    %0 = vector.load %arg3[%c0, %c0_0, %c0_1] : memref<1x4x256xf32, #tpu.memory_space<vmem>>, vector<1x4x256xf32>
    %c0_2 = arith.constant 0 : index
    %c0_3 = arith.constant 0 : index
    %c0_4 = arith.constant 0 : index
    %1 = vector.load %arg4[%c0_2, %c0_3, %c0_4] : memref<1x1x256xf32, #tpu.memory_space<vmem>>, vector<1x1x256xf32>
    %2 = vector.broadcast %1 : vector<1x1x256xf32> to vector<1x4x256xf32>
    %3 = arith.mulf %0, %2 : vector<1x4x256xf32>
    %c0_5 = arith.constant 0 : index
    %c0_6 = arith.constant 0 : index
    %c0_7 = arith.constant 0 : index
    %4 = vector.load %arg5[%c0_5, %c0_6, %c0_7] : memref<1x4x256xf32, #tpu.memory_space<vmem>>, vector<1x4x256xf32>
    tpu.vector_store %arg5[%c0_5, %c0_6, %c0_7], %3 {strides = array<i32>} : memref<1x4x256xf32, #tpu.memory_space<vmem>>, vector<1x4x256xf32>,
    return
  }
  func.func @transform_0(%arg0: i32, %arg1: i32, %arg2: i32) -> (i32, i32, i32) {
    %c0_i32 = arith.constant 0 : i32
    return %arg0, %arg2, %arg1 : i32, i32, i32
  }
  func.func @transform_1(%arg0: i32, %arg1: i32, %arg2: i32) -> (i32, i32, i32) {
    %c0_i32 = arith.constant 0 : i32
    %c0_i32_0 = arith.constant 0 : i32
    return %arg0, %c0_i32, %arg1 : i32, i32, i32
  }
  func.func @transform_2(%arg0: i32, %arg1: i32, %arg2: i32) -> (i32, i32, i32) {
    %c0_i32 = arith.constant 0 : i32
    return %arg0, %arg2, %arg1 : i32, i32, i32
  }
}

</mosaic_0001>

<llo_original>
// kernel: tpu_custom_call.1
$region0: #{tpu_custom_call.1}
  #allocation0 [shape = 'u32[]', space=smem, size = 0x4, offset = 0x4, fixed_abs, tag = 'smem constant byte address 0x4 - core index']
  #allocation1 [shape = 'u32[144,128]{1,0:T(1,128)}', space=vmem, size = 0x12000, scoped, tag = 'internal scratch']
  %s0 = inlined_call_operand.hbm [shape: f32[2,4,256], index: 0, kind: input, shape index: {}]
  %s1 = inlined_call_operand.hbm [shape: f32[2,1,256], index: 1, kind: input, shape index: {}]
  %s2 = inlined_call_operand.hbm [shape: f32[2,4,256], index: 2, kind: output, shape index: {}]
  %s3 = sld [smem:[#allocation0]]
  $region49: #{tpu_custom_call.1} parent=0
    _
  %s5 = ssub.s32 1, %s3
  %s6 = scalar_select 0, %s5, %s3
  $region1: #{tpu_custom_call.1} parent=0
    #allocation2 [shape = 'u8[8192]{0}', space=vmem, size = 0x2000, scoped, tag = 'input window, operand 0']
    #allocation3 [shape = 's32[2]{0}', space=sflag, size = 0x8, scoped, tag = 'scoped memory for tpu_custom_call.1']
    #allocation4 [shape = 's32[2]{0}', space=sflag, size = 0x8, scoped, tag = 'scoped memory for tpu_custom_call.1']
    #allocation5 [shape = 'u8[2048]{0}', space=vmem, size = 0x800, scoped, tag = 'input window, operand 1']
    #allocation6 [shape = 's32[2]{0}', space=sflag, size = 0x8, scoped, tag = 'scoped memory for tpu_custom_call.1']
    #allocation7 [shape = 'u8[8192]{0}', space=vmem, size = 0x2000, scoped, tag = 'output window, operand 0']
    %7 = vsyncpa [#allocation3], 0
    %s8 = scalar_lea.sflag [#allocation3], 1
    %9 = vsyncpa %s8, 0
    %10 = vsyncpa [#allocation6], 0
    %s11 = scalar_lea.sflag [#allocation6], 1
    %12 = vsyncpa %s11, 0
    %13 = vsyncpa [#allocation4], 0
    %s14 = scalar_lea.sflag [#allocation4], 1
    %15 = vsyncpa %s14, 0
    loop: start=0, step=1, limit=4
    $region2: #{tpu_custom_call.1} parent=1 // loop_pre_header
      _
    $region3: #{tpu_custom_call.1} parent=1 // loop_header
      %s17 = sphi 0, %s21
      %p18 = scmp.ge.s32.totalorder %s17, 4
      %s24 = sphi 0, %s43
      %s25 = sphi 0, %s39
      %s26 = sphi 0, %s35
      %s27 = sphi 0, %s24
      %s28 = sphi 0, %s25
      %s29 = sphi 0, %s26
      %s30 = sphi 0, %s27
      %s31 = sphi 0, %s28
      %s32 = sphi 0, %s29
      %s50 = sphi 0, %s52
      %s53 = sphi 0, %s50
      %s54 = sphi 0, %s53
      %s70 = sphi 0, %s54
      %s78 = sphi 0, %s80
      %s81 = sphi 0, %s78
      %s82 = sphi 0, %s81
      %s98 = sphi 0, %s82
      %s108 = sphi 0, %s110
      %s111 = sphi 0, %s108
      %s112 = sphi 0, %s111
      %s128 = sphi 0, %s112
    $region4: #{tpu_custom_call.1} parent=1 // loop_header_branch
      %20 = sbr.rel (%p18) target = $region8
    $region5: #{tpu_custom_call.1} parent=1 // loop_body
      %s22 = ssub.s32 %s17, 1
      %s23 = ssub.s32 %s17, 2
      %s33 = sadd.s32 1, %s26
      %p34 = scmp.ge.s32.totalorder %s33, 1
      %s35 = scalar_select %p34, 0, %s33
      %s36 = sadd.s32 1, %s25
      %s37 = scalar_select %p34, %s36, %s25
      %p38 = scmp.ge.s32.totalorder %s37, 1
      %s39 = scalar_select %p38, 0, %s37
      %s40 = sadd.s32 1, %s24
      %s41 = scalar_select %p38, %s40, %s24
      %p42 = scmp.ge.s32.totalorder %s41, 2
      %s43 = scalar_select %p42, 0, %s41
      %s44 = ssub.s32 %s24, %s43
      %s45 = ssub.s32 %s26, %s35
      %s46 = sor.u32 %s44, %s45
      %s47 = ssub.s32 %s25, %s39
      %s48 = sor.u32 %s46, %s47
      %p49 = scmp.eq.s32.totalorder %s48, 0
      %s51 = sadd.s32 %s50, 1
      %s52 = scalar_select %p49, %s50, %s51
      %p55 = pneg %p49
      %p56 = scmp.eq.s32.totalorder %s17, 1
      %p57 = por %p55, %p56
      %p58 = scmp.ne.s32.totalorder %s50, %s53
      %p59 = scmp.eq.s32.totalorder %s17, 0
      %p60 = por %p58, %p59
      %p61 = scmp.ne.s32.totalorder %s50, %s53
      %p62 = scmp.eq.s32.totalorder %s22, 1
      %p63 = por %p61, %p62
      %p64 = scmp.ne.s32.totalorder %s53, %s54
      %p65 = scmp.eq.s32.totalorder %s22, 0
      %p66 = por %p64, %p65
      %p67 = scmp.ne.s32.totalorder %s53, %s54
      %p68 = scmp.eq.s32.totalorder %s23, 1
      %p69 = por %p67, %p68
      %p71 = scmp.ne.s32.totalorder %s54, %s70
      %p72 = scmp.eq.s32.totalorder %s23, 0
      %p73 = por %p71, %p72
      %s74 = ssub.s32 %s24, %s43
      %s75 = ssub.s32 %s25, %s39
      %s76 = sor.u32 %s74, %s75
      %p77 = scmp.eq.s32.totalorder %s76, 0
      %s79 = sadd.s32 %s78, 1
      %s80 = scalar_select %p77, %s78, %s79
      %p83 = pneg %p77
      %p84 = scmp.eq.s32.totalorder %s17, 1
      %p85 = por %p83, %p84
      %p86 = scmp.ne.s32.totalorder %s78, %s81
      %p87 = scmp.eq.s32.totalorder %s17, 0
      %p88 = por %p86, %p87
      %p89 = scmp.ne.s32.totalorder %s78, %s81
      %p90 = scmp.eq.s32.totalorder %s22, 1
      %p91 = por %p89, %p90
      %p92 = scmp.ne.s32.totalorder %s81, %s82
      %p93 = scmp.eq.s32.totalorder %s22, 0
      %p94 = por %p92, %p93
      %p95 = scmp.ne.s32.totalorder %s81, %s82
      %p96 = scmp.eq.s32.totalorder %s23, 1
      %p97 = por %p95, %p96
      %p99 = scmp.ne.s32.totalorder %s82, %s98
      %p100 = scmp.eq.s32.totalorder %s23, 0
      %p101 = por %p99, %p100
      %s102 = ssub.s32 %s24, %s43
      %s103 = ssub.s32 %s26, %s35
      %s104 = sor.u32 %s102, %s103
      %s105 = ssub.s32 %s25, %s39
      %s106 = sor.u32 %s104, %s105
      %p107 = scmp.eq.s32.totalorder %s106, 0
      %s109 = sadd.s32 %s108, 1
      %s110 = scalar_select %p107, %s108, %s109
      %p113 = pneg %p107
      %p114 = scmp.eq.s32.totalorder %s17, 1
      %p115 = por %p113, %p114
      %p116 = scmp.ne.s32.totalorder %s108, %s111
      %p117 = scmp.eq.s32.totalorder %s17, 0
      %p118 = por %p116, %p117
      %p119 = scmp.ne.s32.totalorder %s108, %s111
      %p120 = scmp.eq.s32.totalorder %s22, 1
      %p121 = por %p119, %p120
      %p122 = scmp.ne.s32.totalorder %s111, %s112
      %p123 = scmp.eq.s32.totalorder %s22, 0
      %p124 = por %p122, %p123
      %p125 = scmp.ne.s32.totalorder %s111, %s112
      %p126 = scmp.eq.s32.totalorder %s23, 1
      %p127 = por %p125, %p126
      %p129 = scmp.ne.s32.totalorder %s112, %s128
      %p130 = scmp.eq.s32.totalorder %s23, 0
      %p131 = por %p129, %p130
      %p132 = scmp.le.s32.totalorder 1, %s17
      %p133 = scmp.lt.s32.totalorder %s17, 3
      %p134 = pnand %p132, %p133
      %p135 = pneg %p134
      // Predicated region
      $region9: #{tpu_custom_call.1} parent=5 // pred_check
        _
      $region10: #{tpu_custom_call.1} parent=5 // pred_check_branch
        %137 = sbr.rel (%p134) target = $region12
      $region11: #{tpu_custom_call.1} parent=5 // pred_region
        %s138 = ssub.s32 %s17, 1
      $region12: #{tpu_custom_call.1} parent=5 // pred_fallthru
        _
      %p139 = scmp.lt.s32.totalorder %s17, 2
      // Predicated region
      $region13: #{tpu_custom_call.1} parent=5 // pred_check
        %p140 = pneg %p139
      $region14: #{tpu_custom_call.1} parent=5 // pred_check_branch
        %142 = sbr.rel (%p140) target = $region16
      $region15: #{tpu_custom_call.1} parent=5 // pred_region
        // Predicated region
        $region17: #{tpu_custom_call.1} parent=15 // pred_check
          %p143 = pneg %p60
        $region18: #{tpu_custom_call.1} parent=15 // pred_check_branch
          %145 = sbr.rel (%p143) target = $region20
        $region19: #{tpu_custom_call.1} parent=15 // pred_region
          %s146 = sand.u32 %s50, 1
          %s147 = scalar_lea.sflag [#allocation3], %s146
          %s148 = sand.u32 %s50, 1
          %s149 = smul.addr %s148, 8
          %s150 = scalar_lea.vmem [#allocation2], %s149
          %s151 = smul.u32 2, %s25
          %s153 = ssub.s32 128, 128
          %154 = vsyncadd %s147, %s153
          %s155 = smul.addr %s26, 2
          %s156 = sadd.s32 %s151, %s155
          %s157 = smul.addr %s24, 2
          %s158 = sadd.s32 %s156, %s157
          %s159 = smul.addr %s158, 64
          %s160 = scalar_lea.hbm %s0, %s159
          %s162 = sshll.u32 %s150, 4
          %s163 = int_to_ptr.vmem [resolvable:$true] %s162
          %165 = dma.hbm_to_vmem [thread:$0]  %s160, 128, %s163, %s147
        $region20: #{tpu_custom_call.1} parent=15 // pred_fallthru
          _
        // Predicated region
        $region21: #{tpu_custom_call.1} parent=15 // pred_check
          %p166 = pneg %p88
        $region22: #{tpu_custom_call.1} parent=15 // pred_check_branch
          %168 = sbr.rel (%p166) target = $region24
        $region23: #{tpu_custom_call.1} parent=15 // pred_region
          %s169 = sand.u32 %s78, 1
          %s170 = scalar_lea.sflag [#allocation6], %s169
          %s171 = sand.u32 %s78, 1
          %s172 = smul.addr %s171, 2
          %s173 = scalar_lea.vmem [#allocation5], %s172
          %s174 = smul.u32 2, %s25
          %s176 = ssub.s32 32, 32
          %177 = vsyncadd %s170, %s176
          %s178 = smul.addr %s24, 2
          %s179 = sadd.s32 %s174, %s178
          %s180 = smul.addr %s179, 16
          %s181 = scalar_lea.hbm %s1, %s180
          %s183 = sshll.u32 %s173, 4
          %s184 = int_to_ptr.vmem [resolvable:$true] %s183
          %186 = dma.hbm_to_vmem [thread:$0]  %s181, 32, %s184, %s170
        $region24: #{tpu_custom_call.1} parent=15 // pred_fallthru
          _
      $region16: #{tpu_custom_call.1} parent=5 // pred_fallthru
        _
      %p187 = scmp.le.s32.totalorder 1, %s17
      %p188 = scmp.lt.s32.totalorder %s17, 3
      %p189 = pnand %p187, %p188
      %p190 = pneg %p189
      // Predicated region
      $region25: #{tpu_custom_call.1} parent=5 // pred_check
        _
      $region26: #{tpu_custom_call.1} parent=5 // pred_check_branch
        %192 = sbr.rel (%p189) target = $region28
      $region27: #{tpu_custom_call.1} parent=5 // pred_region
        %s193 = ssub.s32 %s17, 1
        %s194 = sand.u32 %s53, 1
        %s195 = scalar_lea.sflag [#allocation3], %s194
        %s196 = sand.u32 %s53, 1
        %s197 = smul.addr %s196, 8
        %s198 = scalar_lea.vmem [#allocation2], %s197
        // Predicated region
        $region29: #{tpu_custom_call.1} parent=27 // pred_check
          %p199 = pneg %p66
        $region30: #{tpu_custom_call.1} parent=27 // pred_check_branch
          %201 = sbr.rel (%p199) target = $region32
        $region31: #{tpu_custom_call.1} parent=27 // pred_region
          %202 = dma.done %s195, 128
        $region32: #{tpu_custom_call.1} parent=27 // pred_fallthru
          _
        %s203 = sand.u32 %s81, 1
        %s204 = scalar_lea.sflag [#allocation6], %s203
        %s205 = sand.u32 %s81, 1
        %s206 = smul.addr %s205, 2
        %s207 = scalar_lea.vmem [#allocation5], %s206
        // Predicated region
        $region33: #{tpu_custom_call.1} parent=27 // pred_check
          %p208 = pneg %p94
        $region34: #{tpu_custom_call.1} parent=27 // pred_check_branch
          %210 = sbr.rel (%p208) target = $region36
        $region35: #{tpu_custom_call.1} parent=27 // pred_region
          %211 = dma.done %s204, 32
        $region36: #{tpu_custom_call.1} parent=27 // pred_fallthru
          _
        %s212 = sand.u32 %s53, 1
        %s213 = scalar_lea.sflag [#allocation3], %s212
        %s214 = sand.u32 %s53, 1
        %s215 = smul.addr %s214, 8
        %s216 = scalar_lea.vmem [#allocation2], %s215
        %p217 = pneg %p66
        %p218 = pneg %p63
        %s219 = sand.u32 %s81, 1
        %s220 = scalar_lea.sflag [#allocation6], %s219
        %s221 = sand.u32 %s81, 1
        %s222 = smul.addr %s221, 2
        %s223 = scalar_lea.vmem [#allocation5], %s222
        %p224 = pneg %p94
        %p225 = pneg %p91
        %p226 = pneg %p124
        %p227 = pneg %p121
        %s228 = sand.u32 %s111, 1
        %s229 = scalar_lea.sflag [#allocation4], %s228
        %s230 = sand.u32 %s111, 1
        %s231 = smul.addr %s230, 8
        %s232 = scalar_lea.vmem [#allocation7], %s231
        %s233 = smul.u32 2, %s28
        %s234 = smul.u32 2, %s28
        %s235 = smul.u32 2, %s28
        %v236 = vld [vmem:[%s198] sm:$0xff]
        %v237 = vld [vmem:[%s207] sm:$0x3]
        %v239 = vlaneseq
        %v240 = vshrl.u32 %v239, 7
        %v241 = vsub.s32 0, %v240
        %v242 = vrot.slane %v237, %v241
        %v243 = vlaneseq
        %v244 = vshrl.u32 %v243, 7
        %v245 = vsub.s32 1, %v244
        %v246 = vrot.slane %v237, %v245
        %v247 = vcombine.low %v242, %v246
        %v249 = vmul.f32 %v236, %v247
        %250 = vst [vmem:[%s232] sm:$0xff] %v249
        %s251 = sand.u32 %s111, 1
        %s252 = scalar_lea.sflag [#allocation4], %s251
        %s253 = sand.u32 %s111, 1
        %s254 = smul.addr %s253, 8
        %s255 = scalar_lea.vmem [#allocation7], %s254
        // Predicated region
        $region37: #{tpu_custom_call.1} parent=27 // pred_check
          %p256 = pneg %p121
        $region38: #{tpu_custom_call.1} parent=27 // pred_check_branch
          %258 = sbr.rel (%p256) target = $region40
        $region39: #{tpu_custom_call.1} parent=27 // pred_region
          %s259 = smul.u32 2, %s28
          %s261 = ssub.s32 128, 128
          %262 = vsyncadd %s252, %s261
          %s263 = smul.addr %s29, 2
          %s264 = sadd.s32 %s259, %s263
          %s265 = smul.addr %s27, 2
          %s266 = sadd.s32 %s264, %s265
          %s267 = smul.addr %s266, 64
          %s268 = scalar_lea.hbm %s2, %s267
          %s270 = sshll.u32 %s255, 4
          %s271 = int_to_ptr.vmem [resolvable:$true] %s270
          %273 = dma.vmem_to_hbm [thread:$0]  %s271, 128, %s268, %s252
        $region40: #{tpu_custom_call.1} parent=27 // pred_fallthru
          _
      $region28: #{tpu_custom_call.1} parent=5 // pred_fallthru
        _
      %p274 = scmp.le.s32.totalorder 2, %s17
      // Predicated region
      $region41: #{tpu_custom_call.1} parent=5 // pred_check
        %p275 = pneg %p274
      $region42: #{tpu_custom_call.1} parent=5 // pred_check_branch
        %277 = sbr.rel (%p275) target = $region44
      $region43: #{tpu_custom_call.1} parent=5 // pred_region
        %s278 = ssub.s32 %s17, 2
        // Predicated region
        $region45: #{tpu_custom_call.1} parent=43 // pred_check
          %p279 = pneg %p127
        $region46: #{tpu_custom_call.1} parent=43 // pred_check_branch
          %281 = sbr.rel (%p279) target = $region48
        $region47: #{tpu_custom_call.1} parent=43 // pred_region
          %s282 = sand.u32 %s112, 1
          %s283 = scalar_lea.sflag [#allocation4], %s282
          %s284 = sand.u32 %s112, 1
          %s285 = smul.addr %s284, 8
          %s286 = scalar_lea.vmem [#allocation7], %s285
          %287 = dma.done %s283, 128
        $region48: #{tpu_custom_call.1} parent=43 // pred_fallthru
          _
      $region44: #{tpu_custom_call.1} parent=5 // pred_fallthru
        _
    $region6: #{tpu_custom_call.1} parent=1 // loop_footer
      %s21 = sadd.s32 1, %s17
    $region7: #{tpu_custom_call.1} parent=1 // loop_footer_branch
      %16 = sbr.rel target = $region3
    $region8: #{tpu_custom_call.1} parent=1 // loop_exit
      _
    %288 = vsyncpa [#allocation3], 1
    %s289 = scalar_lea.sflag [#allocation3], 1
    %290 = vsyncpa %s289, 1
    %291 = vsyncpa [#allocation6], 1
    %s292 = scalar_lea.sflag [#allocation6], 1
    %293 = vsyncpa %s292, 1
    %294 = vsyncpa [#allocation4], 1
    %s295 = scalar_lea.sflag [#allocation4], 1
    %296 = vsyncpa %s295, 1

</llo_original>
